<compile_context>
chip_gen: v7x
topology: tpu7x:2x2x1
jax: 0.10.0
libtpu: 0.0.40
codegen_flags: <defaults>
</compile_context>

<pallas_src>
import jax
import jax.numpy as jnp
from jax.experimental import pallas as pl
from jax.experimental.pallas import tpu as pltpu

# ---- module hyperparameters (stand-ins for the script-level globals) ----
K = 3                     # k
NUM_NODE_FEATURES = 32    # num_node_features
USE_LINEAR = True         # use_linear (True -> final nn.Linear(F, 1, bias=False))
USE_MAX = False           # use_max   (False -> aggr='add')
# fix_root / tuning_step have no effect on the forward compute -> ignored.
# TODO(synk): use_linear=False path (fixed e-vector matvec) and aggr='max' variant not implemented.


def _round_up(x, m):
    return (x + m - 1) // m * m


def _graphconv_body(a_ref, x_ref, wrel_ref, wroot_ref):
    """One row tile of relu(A_tile @ x @ W_rel^T + x_tile @ W_root^T), f32 result."""
    tm = a_ref.shape[0]
    row0 = pl.multiple_of(pl.program_id(0) * tm, tm)
    # Neighbor add-aggregation on the MXU (bf16 operands, f32 accumulation).
    agg = jnp.dot(a_ref[...], x_ref[...], preferred_element_type=jnp.float32)
    # This tile's own rows of x (aligned dynamic slice of the resident buffer).
    x_tile = x_ref[pl.ds(row0, tm), :]
    # Two MXU pushes added in f32 registers -- no VMEM scratch round trip between them.
    out = (jnp.dot(agg.astype(jnp.bfloat16), wrel_ref[...],
                   preferred_element_type=jnp.float32)
           + jnp.dot(x_tile, wroot_ref[...], preferred_element_type=jnp.float32))
    # ReLU kept in f32 on the VPU (v5e has no bf16 VALU; cheap relative to the MXU work).
    return jnp.maximum(out, 0.0)


def graphconv_kernel(a_ref, x_ref, wrel_ref, wroot_ref, o_ref):
    """Intermediate GraphConv layer: writes the bf16 activation tile (carried to the next call)."""
    o_ref[...] = _graphconv_body(a_ref, x_ref, wrel_ref, wroot_ref).astype(o_ref.dtype)


def graphconv_final_kernel(a_ref, x_ref, wrel_ref, wroot_ref, wlin_ref, o_ref):
    """Last GraphConv layer with the Linear(F, 1, bias=False) epilogue fused in."""
    act = _graphconv_body(a_ref, x_ref, wrel_ref, wroot_ref)          # (TM, F) f32
    # Final linear as VPU multiply + lane reduce (skips a 1/128-wide MXU pass).
    # TODO(synk): output stays (TM, 1) (sub-128-lane masked stores); a lane-dense (1, N)
    #             layout needs a sublane->lane relayout and buys ~nothing at this output size.
    o_ref[...] = jnp.sum(act * wlin_ref[...], axis=-1, keepdims=True)


def gconv_forward(x, edge_index, w_rel, w_root, w_lin, *, tm_target=512):
    """x: (N, F) f32, edge_index: (2, E) int32 [src; dst], weights in PyTorch (out, in) layout."""
    assert K >= 2, "forward below assumes at least one GraphConv layer"
    n, f = x.shape
    tm = min(tm_target, _round_up(n, 8))      # row tile; 512 amortizes grid overhead on v6e/v7x
    n_pad = _round_up(n, tm)                  # zero-padded rows are inert (A rows/cols are 0)
    grid = (n_pad // tm,)

    src, dst = edge_index[0], edge_index[1]
    # Dense adjacency scattered DIRECTLY into bf16 (0/1 entries exact; avoids the f32 N^2
    # intermediate + full-array cast). A[i, j] = multiplicity of edge j -> i.
    # NOTE: bf16 is exact only while per-entry multiplicity stays <= 256 (fine for simple graphs).
    a = jnp.zeros((n_pad, n_pad), jnp.bfloat16).at[dst, src].add(
        jnp.asarray(1.0, jnp.bfloat16))
    # TODO(synk): for E << N^2 a CSR/gather aggregation (PrefetchScalarGridSpec driving row
    #             gathers) changes the complexity class; dense A kept to mirror the dense matmul.
    # TODO(synk): on v7x, fp8 A (exact for 0/1) would halve A traffic if Mosaic accepts the
    #             mixed fp8 x bf16 dot; left in bf16 here for portability.

    x_bf = jnp.zeros((n_pad, f), jnp.bfloat16).at[:n, :].set(x.astype(jnp.bfloat16))
    wrel_t = jnp.asarray(w_rel, jnp.float32).T.astype(jnp.bfloat16)     # (F, F) = W_rel^T
    wroot_t = jnp.asarray(w_root, jnp.float32).T.astype(jnp.bfloat16)   # (F, F) = W_root^T
    wlin_row = jnp.asarray(w_lin, jnp.float32).reshape(1, f)            # f32 for the VPU reduce

    a_spec = pl.BlockSpec((tm, n_pad), lambda i: (i, 0))       # streamed row tiles of A
    x_spec = pl.BlockSpec((n_pad, f), lambda i: (0, 0))        # resident activations
    w_spec = pl.BlockSpec((f, f), lambda i: (0, 0))            # resident weights
    wlin_spec = pl.BlockSpec((1, f), lambda i: (0, 0))
    mid_out_spec = pl.BlockSpec((tm, f), lambda i: (i, 0))
    fin_out_spec = pl.BlockSpec((tm, 1), lambda i: (i, 0))

    # Conservative working-set estimate (everything double-buffered, lanes padded to 128).
    lane = 128
    work = (2 * tm * n_pad * 2                       # A tiles (bf16)
            + 2 * n_pad * max(f, lane) * 2           # resident x (bf16)
            + 2 * 2 * f * max(f, lane) * 2           # W_rel^T, W_root^T (bf16)
            + 2 * max(f, lane) * 4                   # w_lin row (f32)
            + 2 * tm * max(f, lane) * 4)             # output tile (f32 upper bound)
    vmem_limit = int(min(max(2 * work, 16 << 20), 64 << 20))

    cparams = pltpu.CompilerParams(
        dimension_semantics=("parallel",),           # independent row tiles -> megacore-shardable
        vmem_limit_bytes=vmem_limit)

    layer_flops = 2 * n_pad * n_pad * f + 2 * (2 * n_pad * f * f)
    layer_bytes = n_pad * n_pad * 2 + 2 * n_pad * f * 2 + 2 * f * f * 2
    mid_cost = pl.CostEstimate(flops=int(layer_flops), transcendentals=0,
                               bytes_accessed=int(layer_bytes))
    fin_cost = pl.CostEstimate(flops=int(layer_flops + 2 * n_pad * f), transcendentals=0,
                               bytes_accessed=int(layer_bytes + f * 4 + n_pad * 4))

    out = None
    for layer in range(K - 1):
        if layer < K - 2:
            x_bf = pl.pallas_call(
                graphconv_kernel,
                out_shape=jax.ShapeDtypeStruct((n_pad, f), jnp.bfloat16),
                grid=grid,
                in_specs=[a_spec, x_spec, w_spec, w_spec],
                out_specs=mid_out_spec,
                compiler_params=cparams,
                cost_estimate=mid_cost,
            )(a, x_bf, wrel_t, wroot_t)
        else:
            out = pl.pallas_call(
                graphconv_final_kernel,
                out_shape=jax.ShapeDtypeStruct((n_pad, 1), jnp.float32),
                grid=grid,
                in_specs=[a_spec, x_spec, w_spec, w_spec, wlin_spec],
                out_specs=fin_out_spec,
                compiler_params=cparams,
                cost_estimate=fin_cost,
            )(a, x_bf, wrel_t, wroot_t, wlin_row)

    return out[:n]


def gconv_ref(x, edge_index, w_rel, w_root, w_lin):
    """Plain-JAX f32 reference of the same forward."""
    n = x.shape[0]
    src, dst = edge_index[0], edge_index[1]
    a = jnp.zeros((n, n), jnp.float32).at[dst, src].add(1.0)
    for _ in range(K - 1):
        x = jnp.maximum(a @ x @ w_rel.T + x @ w_root.T, 0.0)
    return x @ w_lin.T


if __name__ == "__main__":
    N, F = 128, NUM_NODE_FEATURES

    key = jax.random.PRNGKey(0)
    kx, kr, ko, kl = jax.random.split(key, 4)

    # Node features.
    x = jax.random.normal(kx, (N, F), dtype=jnp.float32)

    # Deterministic bidirectional ring graph: edges (i, i+1) and (i+1, i).
    idx = jnp.arange(N, dtype=jnp.int32)
    src = jnp.concatenate([idx, (idx + 1) % N])
    dst = jnp.concatenate([(idx + 1) % N, idx])
    edge_index = jnp.stack([src, dst])          # (2, 2N)

    # batch vector (present in the PyTorch signature but unused in forward).
    batch = jnp.zeros((N,), dtype=jnp.int32)

    # Deterministic weight init (uniform, Kaiming-style bound), PyTorch (out, in) layout.
    bound = 1.0 / jnp.sqrt(jnp.float32(F))
    w_rel = jax.random.uniform(kr, (F, F), jnp.float32, -bound, bound)   # conv1.lin_rel.weight
    w_root = jax.random.uniform(ko, (F, F), jnp.float32, -bound, bound)  # conv1.lin_root.weight
    w_lin = jax.random.uniform(kl, (1, F), jnp.float32, -bound, bound)   # linear.weight

    out = gconv_forward(x, edge_index, w_rel, w_root, w_lin)
    out = jax.block_until_ready(out)

    ref = gconv_ref(x, edge_index, w_rel, w_root, w_lin)
    assert out.shape == (N, 1), out.shape
    # bf16 matmul operands (f32 accumulation) across K-1 layers -> relaxed tolerance vs f32 ref.
    assert jnp.allclose(out, ref, atol=5e-2, rtol=5e-2), "mismatch vs. JAX reference"

    print("KERNEL_OK")
</pallas_src>

<mosaic_0001>
module attributes {stable_mosaic.version = 11 : i64} {
  func.func @graphconv_kernel(%arg0: i32, %arg1: memref<128x128xbf16, #tpu.memory_space<vmem>>, %arg2: memref<128x32xbf16, #tpu.memory_space<vmem>>, %arg3: memref<32x32xbf16, #tpu.memory_space<vmem>>, %arg4: memref<32x32xbf16, #tpu.memory_space<vmem>>, %arg5: memref<128x32xbf16, #tpu.memory_space<vmem>>) attributes {dimension_semantics = [#tpu.dimension_semantics<parallel>], iteration_bounds = array<i64: 1>, scalar_prefetch = 0 : i64, scratch_operands = 0 : i64, tpu.core_type = #tpu.core_type<tc>, window_params = [{transform_indices = @transform_0, window_bounds = array<i64: 128, 128>}, {pipeline_mode = #tpu.pipeline_mode<synchronous>, transform_indices = @transform_1, window_bounds = array<i64: 128, 32>}, {pipeline_mode = #tpu.pipeline_mode<synchronous>, transform_indices = @transform_2, window_bounds = array<i64: 32, 32>}, {pipeline_mode = #tpu.pipeline_mode<synchronous>, transform_indices = @transform_3, window_bounds = array<i64: 32, 32>}, {transform_indices = @transform_4, window_bounds = array<i64: 128, 32>}]} {
    %c128_i32 = arith.constant 128 : i32
    %0 = arith.muli %arg0, %c128_i32 : i32
    %1 = tpu.assume_multiple %0, 128 : i32
    %c0 = arith.constant 0 : index
    %c0_0 = arith.constant 0 : index
    %2 = vector.load %arg1[%c0, %c0_0] : memref<128x128xbf16, #tpu.memory_space<vmem>>, vector<128x128xbf16>
    %c0_1 = arith.constant 0 : index
    %c0_2 = arith.constant 0 : index
    %3 = vector.load %arg2[%c0_1, %c0_2] : memref<128x32xbf16, #tpu.memory_space<vmem>>, vector<128x32xbf16>
    %cst = arith.constant dense<0.000000e+00> : vector<128x32xf32>
    %4 = tpu.matmul %2, %3, %cst {dimension_numbers = #tpu.dot_dimension_numbers<[1], [0], [0], [1], [0, 0, 1, 1], [], []>} : vector<128x128xbf16>, vector<128x32xbf16>, vector<128x32xf32> -> vector<128x32xf32>
    %5 = arith.index_cast %1 : i32 to index
    %c0_3 = arith.constant 0 : index
    %6 = vector.load %arg2[%5, %c0_3] : memref<128x32xbf16, #tpu.memory_space<vmem>>, vector<128x32xbf16>
    %7 = arith.truncf %4 : vector<128x32xf32> to vector<128x32xbf16>
    %c0_4 = arith.constant 0 : index
    %c0_5 = arith.constant 0 : index
    %8 = vector.load %arg3[%c0_4, %c0_5] : memref<32x32xbf16, #tpu.memory_space<vmem>>, vector<32x32xbf16>
    %cst_6 = arith.constant dense<0.000000e+00> : vector<128x32xf32>
    %9 = tpu.matmul %7, %8, %cst_6 {dimension_numbers = #tpu.dot_dimension_numbers<[1], [0], [0], [1], [0, 0, 1, 1], [], []>} : vector<128x32xbf16>, vector<32x32xbf16>, vector<128x32xf32> -> vector<128x32xf32>
    %c0_7 = arith.constant 0 : index
    %c0_8 = arith.constant 0 : index
    %10 = vector.load %arg4[%c0_7, %c0_8] : memref<32x32xbf16, #tpu.memory_space<vmem>>, vector<32x32xbf16>
    %cst_9 = arith.constant dense<0.000000e+00> : vector<128x32xf32>
    %11 = tpu.matmul %6, %10, %cst_9 {dimension_numbers = #tpu.dot_dimension_numbers<[1], [0], [0], [1], [0, 0, 1, 1], [], []>} : vector<128x32xbf16>, vector<32x32xbf16>, vector<128x32xf32> -> vector<128x32xf32>
    %12 = arith.addf %9, %11 : vector<128x32xf32>
    %cst_10 = arith.constant 0.000000e+00 : f32
    %13 = vector.broadcast %cst_10 : f32 to vector<128x32xf32>
    %14 = arith.maximumf %12, %13 : vector<128x32xf32>
    %15 = arith.truncf %14 : vector<128x32xf32> to vector<128x32xbf16>
    %c0_11 = arith.constant 0 : index
    %c0_12 = arith.constant 0 : index
    %16 = vector.load %arg5[%c0_11, %c0_12] : memref<128x32xbf16, #tpu.memory_space<vmem>>, vector<128x32xbf16>
    tpu.vector_store %arg5[%c0_11, %c0_12], %15 {strides = array<i32>} : memref<128x32xbf16, #tpu.memory_space<vmem>>, vector<128x32xbf16>,
    return
  }
  func.func @transform_0(%arg0: i32) -> (i32, i32) {
    %c0_i32 = arith.constant 0 : i32
    %c0_i32_0 = arith.constant 0 : i32
    return %arg0, %c0_i32 : i32, i32
  }
  func.func @transform_1(%arg0: i32) -> (i32, i32) {
    %c0_i32 = arith.constant 0 : i32
    %c0_i32_0 = arith.constant 0 : i32
    %c0_i32_1 = arith.constant 0 : i32
    return %c0_i32, %c0_i32_0 : i32, i32
  }
  func.func @transform_2(%arg0: i32) -> (i32, i32) {
    %c0_i32 = arith.constant 0 : i32
    %c0_i32_0 = arith.constant 0 : i32
    %c0_i32_1 = arith.constant 0 : i32
    return %c0_i32, %c0_i32_0 : i32, i32
  }
  func.func @transform_3(%arg0: i32) -> (i32, i32) {
    %c0_i32 = arith.constant 0 : i32
    %c0_i32_0 = arith.constant 0 : i32
    %c0_i32_1 = arith.constant 0 : i32
    return %c0_i32, %c0_i32_0 : i32, i32
  }
  func.func @transform_4(%arg0: i32) -> (i32, i32) {
    %c0_i32 = arith.constant 0 : i32
    %c0_i32_0 = arith.constant 0 : i32
    return %arg0, %c0_i32 : i32, i32
  }
}

</mosaic_0001>

<llo_original>
// kernel: tpu_custom_call.1
$region0: #{tpu_custom_call.1}
  #allocation0 [shape = 'u32[]', space=smem, size = 0x4, offset = 0x4, fixed_abs, tag = 'smem constant byte address 0x4 - core index']
  #allocation1 [shape = 'u32[144,128]{1,0:T(1,128)}', space=vmem, size = 0x12000, scoped, tag = 'internal scratch']
  %s0 = inlined_call_operand.vmem [shape: bf16[128,128], index: 0, kind: input, shape index: {}]
  %s1 = inlined_call_operand.vmem [shape: bf16[128,32], index: 1, kind: input, shape index: {}]
  %s2 = inlined_call_operand.vmem [shape: bf16[32,32], index: 2, kind: input, shape index: {}]
  %s3 = inlined_call_operand.hbm [shape: bf16[32,32], index: 3, kind: input, shape index: {}]
  %s4 = inlined_call_operand.vmem [shape: bf16[128,32], index: 4, kind: output, shape index: {}]
  %s5 = sld [smem:[#allocation0]]
  $region30: #{tpu_custom_call.1} parent=0
    _
  %s7 = ssub.s32 1, %s5
  %s8 = scalar_select 0, %s7, %s5
  $region1: #{tpu_custom_call.1} parent=0
    #allocation2 [shape = 'u8[8192]{0}', space=vmem, size = 0x2000, scoped, tag = 'input window, operand 3, single buffered']
    #allocation3 [shape = 's32[1]{0}', space=sflag, size = 0x4, scoped, tag = 'scoped memory for tpu_custom_call.1']
    %9 = vsyncpa [#allocation3], 0
    // Predicated region
    $region2: #{tpu_custom_call.1} parent=1 // pred_check
      _
    $region3: #{tpu_custom_call.1} parent=1 // pred_check_branch
      %11 = sbr.rel (0) target = $region5
    $region4: #{tpu_custom_call.1} parent=1 // pred_region
      _
    $region5: #{tpu_custom_call.1} parent=1 // pred_fallthru
      _
    // Predicated region
    $region6: #{tpu_custom_call.1} parent=1 // pred_check
      _
    $region7: #{tpu_custom_call.1} parent=1 // pred_check_branch
      %13 = sbr.rel (0) target = $region9
    $region8: #{tpu_custom_call.1} parent=1 // pred_region
      _
    $region9: #{tpu_custom_call.1} parent=1 // pred_fallthru
      _
    // Predicated region
    $region10: #{tpu_custom_call.1} parent=1 // pred_check
      _
    $region11: #{tpu_custom_call.1} parent=1 // pred_check_branch
      %15 = sbr.rel (0) target = $region13
    $region12: #{tpu_custom_call.1} parent=1 // pred_region
      _
    $region13: #{tpu_custom_call.1} parent=1 // pred_fallthru
      _
    // Predicated region
    $region14: #{tpu_custom_call.1} parent=1 // pred_check
      _
    $region15: #{tpu_custom_call.1} parent=1 // pred_check_branch
      %17 = sbr.rel (0) target = $region17
    $region16: #{tpu_custom_call.1} parent=1 // pred_region
      %s19 = ssub.s32 256, 256
      %20 = vsyncadd [#allocation3], %s19
      %s21 = sshll.u32 [#allocation2], 4
      %s22 = int_to_ptr.vmem [resolvable:$true] %s21
      %27 = dma.hbm_to_vmem [thread:$0]  %s3, 256, %s22, [#allocation3], 64, 64, 4
    $region17: #{tpu_custom_call.1} parent=1 // pred_fallthru
      _
    // Predicated region
    $region18: #{tpu_custom_call.1} parent=1 // pred_check
      _
    $region19: #{tpu_custom_call.1} parent=1 // pred_check_branch
      %29 = sbr.rel (0) target = $region21
    $region20: #{tpu_custom_call.1} parent=1 // pred_region
      %30 = dma.done [#allocation3], 256
    $region21: #{tpu_custom_call.1} parent=1 // pred_fallthru
      _
    %s32 = smul.u32 0, 128
    %v33 = vld [vmem:[%s0] sm:$0xf]
    %v34 = vld [vmem:[%s0 + $0x4] sm:$0xf]
    %v35 = vld [vmem:[%s0 + $0x8] sm:$0xf]
    %v36 = vld [vmem:[%s0 + $0xc] sm:$0xf]
    %v37 = vld [vmem:[%s0 + $0x10] sm:$0xf]
    %v38 = vld [vmem:[%s0 + $0x14] sm:$0xf]
    %v39 = vld [vmem:[%s0 + $0x18] sm:$0xf]
    %v40 = vld [vmem:[%s0 + $0x1c] sm:$0xf]
    %v41 = vld [vmem:[%s0 + $0x20] sm:$0xf]
    %v42 = vld [vmem:[%s0 + $0x24] sm:$0xf]
    %v43 = vld [vmem:[%s0 + $0x28] sm:$0xf]
    %v44 = vld [vmem:[%s0 + $0x2c] sm:$0xf]
    %v45 = vld [vmem:[%s0 + $0x30] sm:$0xf]
    %v46 = vld [vmem:[%s0 + $0x34] sm:$0xf]
    %v47 = vld [vmem:[%s0 + $0x38] sm:$0xf]
    %v48 = vld [vmem:[%s0 + $0x3c] sm:$0xf]
    %v49 = vld [vmem:[%s1] sm:$0xf]
    %v50 = vld [vmem:[%s1 + $0x4] sm:$0xf]
    %v51 = vld [vmem:[%s1 + $0x8] sm:$0xf]
    %v52 = vld [vmem:[%s1 + $0xc] sm:$0xf]
    %v53 = vld [vmem:[%s1 + $0x10] sm:$0xf]
    %v54 = vld [vmem:[%s1 + $0x14] sm:$0xf]
    %v55 = vld [vmem:[%s1 + $0x18] sm:$0xf]
    %v56 = vld [vmem:[%s1 + $0x1c] sm:$0xf]
    %v57 = vld [vmem:[%s1 + $0x20] sm:$0xf]
    %v58 = vld [vmem:[%s1 + $0x24] sm:$0xf]
    %v59 = vld [vmem:[%s1 + $0x28] sm:$0xf]
    %v60 = vld [vmem:[%s1 + $0x2c] sm:$0xf]
    %v61 = vld [vmem:[%s1 + $0x30] sm:$0xf]
    %v62 = vld [vmem:[%s1 + $0x34] sm:$0xf]
    %v63 = vld [vmem:[%s1 + $0x38] sm:$0xf]
    %v64 = vld [vmem:[%s1 + $0x3c] sm:$0xf]
    %v81 = vunpack.c.l.b16 %v33
    %v82 = vunpack.c.l.b16 %v34
    %v83 = vunpack.c.l.b16 %v35
    %v84 = vunpack.c.l.b16 %v36
    %v85 = vunpack.c.l.b16 %v37
    %v86 = vunpack.c.l.b16 %v38
    %v87 = vunpack.c.l.b16 %v39
    %v88 = vunpack.c.l.b16 %v40
    %v89 = vunpack.c.l.b16 %v41
    %v90 = vunpack.c.l.b16 %v42
    %v91 = vunpack.c.l.b16 %v43
    %v92 = vunpack.c.l.b16 %v44
    %v93 = vunpack.c.l.b16 %v45
    %v94 = vunpack.c.l.b16 %v46
    %v95 = vunpack.c.l.b16 %v47
    %v96 = vunpack.c.l.b16 %v48
    %v97 = vpack.c.b16 %v82, %v81
    %v98 = vpack.c.b16 %v84, %v83
    %v99 = vpack.c.b16 %v86, %v85
    %v100 = vpack.c.b16 %v88, %v87
    %v101 = vpack.c.b16 %v90, %v89
    %v102 = vpack.c.b16 %v92, %v91
    %v103 = vpack.c.b16 %v94, %v93
    %v104 = vpack.c.b16 %v96, %v95
    %v129 = vunpack.c.l.b16 %v49
    %v130 = vunpack.c.l.b16 %v50
    %v131 = vunpack.c.l.b16 %v51
    %v132 = vunpack.c.l.b16 %v52
    %v133 = vunpack.c.l.b16 %v53
    %v134 = vunpack.c.l.b16 %v54
    %v135 = vunpack.c.l.b16 %v55
    %v136 = vunpack.c.l.b16 %v56
    %v137 = vunpack.c.l.b16 %v57
    %v138 = vunpack.c.l.b16 %v58
    %v139 = vunpack.c.l.b16 %v59
    %v140 = vunpack.c.l.b16 %v60
    %v141 = vunpack.c.l.b16 %v61
    %v142 = vunpack.c.l.b16 %v62
    %v143 = vunpack.c.l.b16 %v63
    %v144 = vunpack.c.l.b16 %v64
    %v145 = vpack.c.b16 %v130, %v129
    %v146 = vpack.c.b16 %v132, %v131
    %v147 = vpack.c.b16 %v134, %v133
    %v148 = vpack.c.b16 %v136, %v135
    %v149 = vpack.c.b16 %v138, %v137
    %v150 = vpack.c.b16 %v140, %v139
    %v151 = vpack.c.b16 %v142, %v141
    %v152 = vpack.c.b16 %v144, %v143
    %161 = vmatprep.subr.bf16.mxu0 0
    %162 = vmatpush1.bf16.msra.mxu0 %v145
    %163 = vmatprep.subr.bf16.mxu0 0
    %164 = vmatpush1.bf16.msra.mxu0 %v146
    %165 = vmatprep.subr.bf16.mxu0 0
    %166 = vmatpush1.bf16.msra.mxu0 %v147
    %167 = vmatprep.subr.bf16.mxu0 0
    %168 = vmatpush1.bf16.msra.mxu0 %v148
    %169 = vmatprep.subr.bf16.mxu0 0
    %170 = vmatpush1.bf16.msra.mxu0 %v149
    %171 = vmatprep.subr.bf16.mxu0 0
    %172 = vmatpush1.bf16.msra.mxu0 %v150
    %173 = vmatprep.subr.bf16.mxu0 0
    %174 = vmatpush1.bf16.msra.mxu0 %v151
    %175 = vmatprep.subr.bf16.mxu0 0
    %176 = vmatpush1.bf16.msra.mxu0 %v152
    %177 = vmatprep.subr.bf16.mxu0 0
    %178 = vmatpush1.bf16.msra.mxu0 0
    %179 = vmatprep.subr.bf16.mxu0 0
    %180 = vmatpush1.bf16.msra.mxu0 0
    %181 = vmatprep.subr.bf16.mxu0 0
    %182 = vmatpush1.bf16.msra.mxu0 0
    %183 = vmatprep.subr.bf16.mxu0 0
    %184 = vmatpush1.bf16.msra.mxu0 0
    %185 = vmatprep.subr.bf16.mxu0 0
    %186 = vmatpush1.bf16.msra.mxu0 0
    %187 = vmatprep.subr.bf16.mxu0 0
    %188 = vmatpush1.bf16.msra.mxu0 0
    %189 = vmatprep.subr.bf16.mxu0 0
    %190 = vmatpush1.bf16.msra.mxu0 0
    %191 = vmatprep.subr.bf16.mxu0 0
    %192 = vmatpush1.bf16.msra.mxu0 0
    %193 = vmatprep.mubr.bf16.mxu0 0
    %194 = vmatmul.mubr.bf16.gmra.mrb[0].mxu0 %v97
    %v195 = vpop.f32.mrb[0].mxu0
    %v196 = vadd.f32 0.0, %v195
    %v197 = vpop.f32.mrb[0].mxu0
    %v198 = vpop.f32.mrb[0].mxu0
    %v199 = vadd.f32 0.0, %v198
    %v200 = vpop.f32.mrb[0].mxu0
    %201 = vmatprep.mubr.bf16.mxu0 0
    %202 = vmatmul.mubr.bf16.gmra.mrb[0].mxu0 %v98
    %v203 = vpop.f32.mrb[0].mxu0
    %v204 = vadd.f32 0.0, %v203
    %v205 = vpop.f32.mrb[0].mxu0
    %v206 = vpop.f32.mrb[0].mxu0
    %v207 = vadd.f32 0.0, %v206
    %v208 = vpop.f32.mrb[0].mxu0
    %209 = vmatprep.mubr.bf16.mxu0 0
    %210 = vmatmul.mubr.bf16.gmra.mrb[0].mxu0 %v99
    %v211 = vpop.f32.mrb[0].mxu0
    %v212 = vadd.f32 0.0, %v211
    %v213 = vpop.f32.mrb[0].mxu0
    %v214 = vpop.f32.mrb[0].mxu0
    %v215 = vadd.f32 0.0, %v214
    %v216 = vpop.f32.mrb[0].mxu0
    %217 = vmatprep.mubr.bf16.mxu0 0
    %218 = vmatmul.mubr.bf16.gmra.mrb[0].mxu0 %v100
    %v219 = vpop.f32.mrb[0].mxu0
    %v220 = vadd.f32 0.0, %v219
    %v221 = vpop.f32.mrb[0].mxu0
    %v222 = vpop.f32.mrb[0].mxu0
    %v223 = vadd.f32 0.0, %v222
    %v224 = vpop.f32.mrb[0].mxu0
    %225 = vmatprep.mubr.bf16.mxu0 0
    %226 = vmatmul.mubr.bf16.gmra.mrb[0].mxu0 %v101
    %v227 = vpop.f32.mrb[0].mxu0
    %v228 = vadd.f32 0.0, %v227
    %v229 = vpop.f32.mrb[0].mxu0
    %v230 = vpop.f32.mrb[0].mxu0
    %v231 = vadd.f32 0.0, %v230
    %v232 = vpop.f32.mrb[0].mxu0
    %233 = vmatprep.mubr.bf16.mxu0 0
    %234 = vmatmul.mubr.bf16.gmra.mrb[0].mxu0 %v102
    %v235 = vpop.f32.mrb[0].mxu0
    %v236 = vadd.f32 0.0, %v235
    %v237 = vpop.f32.mrb[0].mxu0
    %v238 = vpop.f32.mrb[0].mxu0
    %v239 = vadd.f32 0.0, %v238
    %v240 = vpop.f32.mrb[0].mxu0
    %241 = vmatprep.mubr.bf16.mxu0 0
    %242 = vmatmul.mubr.bf16.gmra.mrb[0].mxu0 %v103
    %v243 = vpop.f32.mrb[0].mxu0
    %v244 = vadd.f32 0.0, %v243
    %v245 = vpop.f32.mrb[0].mxu0
    %v246 = vpop.f32.mrb[0].mxu0
    %v247 = vadd.f32 0.0, %v246
    %v248 = vpop.f32.mrb[0].mxu0
    %249 = vmatprep.mubr.bf16.mxu0 0
    %250 = vmatmul.mubr.bf16.gmra.mrb[0].mxu0 %v104
    %v251 = vpop.f32.mrb[0].mxu0
    %v252 = vadd.f32 0.0, %v251
    %v253 = vpop.f32.mrb[0].mxu0
    %v254 = vpop.f32.mrb[0].mxu0
    %v255 = vadd.f32 0.0, %v254
    %v256 = vpop.f32.mrb[0].mxu0
    %257 = vdwg.mxu0
    %s258 = sshra.s32 %s32, 3
    %s259 = sand.u32 %s32, 7
    %s260 = smul.addr %s258, 4
    %s261 = scalar_lea.vmem %s1, %s260
    %v262 = vld [vmem:[%s261] sm:$0xf]
    %v263 = vld [vmem:[%s261 + $0x4] sm:$0xf]
    %v264 = vld [vmem:[%s261 + $0x8] sm:$0xf]
    %v265 = vld [vmem:[%s261 + $0xc] sm:$0xf]
    %v266 = vld [vmem:[%s261 + $0x10] sm:$0xf]
    %v267 = vld [vmem:[%s261 + $0x14] sm:$0xf]
    %v268 = vld [vmem:[%s261 + $0x18] sm:$0xf]
    %v269 = vld [vmem:[%s261 + $0x1c] sm:$0xf]
    %v270 = vld [vmem:[%s261 + $0x20] sm:$0xf]
    %v271 = vld [vmem:[%s261 + $0x24] sm:$0xf]
    %v272 = vld [vmem:[%s261 + $0x28] sm:$0xf]
    %v273 = vld [vmem:[%s261 + $0x2c] sm:$0xf]
    %v274 = vld [vmem:[%s261 + $0x30] sm:$0xf]
    %v275 = vld [vmem:[%s261 + $0x34] sm:$0xf]
    %v276 = vld [vmem:[%s261 + $0x38] sm:$0xf]
    %v277 = vld [vmem:[%s261 + $0x3c] sm:$0xf]
    %v278 = vpack.c.bf16 %v199, %v196
    %v279 = vpack.c.bf16 %v207, %v204
    %v280 = vpack.c.bf16 %v215, %v212
    %v281 = vpack.c.bf16 %v223, %v220
    %v282 = vpack.c.bf16 %v231, %v228
    %v283 = vpack.c.bf16 %v239, %v236
    %v284 = vpack.c.bf16 %v247, %v244
    %v285 = vpack.c.bf16 %v255, %v252
    %v286 = vld [vmem:[%s2] sm:$0xf]
    %v287 = vld [vmem:[%s2 + $0x4] sm:$0xf]
    %v288 = vld [vmem:[%s2 + $0x8] sm:$0xf]
    %v289 = vld [vmem:[%s2 + $0xc] sm:$0xf]
    %v290 = vld [vmem:[#allocation2] sm:$0xf]
    %v291 = vld [vmem:[#allocation2 + $0x4] sm:$0xf]
    %v292 = vld [vmem:[#allocation2 + $0x8] sm:$0xf]
    %v293 = vld [vmem:[#allocation2 + $0xc] sm:$0xf]
    %v310 = vunpack.c.l.b16 %v262
    %v311 = vunpack.c.l.b16 %v263
    %v312 = vunpack.c.l.b16 %v264
    %v313 = vunpack.c.l.b16 %v265
    %v314 = vunpack.c.l.b16 %v266
    %v315 = vunpack.c.l.b16 %v267
    %v316 = vunpack.c.l.b16 %v268
    %v317 = vunpack.c.l.b16 %v269
    %v318 = vunpack.c.l.b16 %v270
    %v319 = vunpack.c.l.b16 %v271
    %v320 = vunpack.c.l.b16 %v272
    %v321 = vunpack.c.l.b16 %v273
    %v322 = vunpack.c.l.b16 %v274
    %v323 = vunpack.c.l.b16 %v275
    %v324 = vunpack.c.l.b16 %v276
    %v325 = vunpack.c.l.b16 %v277
    %v326 = vpack.c.b16 %v311, %v310
    %v327 = vpack.c.b16 %v313, %v312
    %v328 = vpack.c.b16 %v315, %v314
    %v329 = vpack.c.b16 %v317, %v316
    %v330 = vpack.c.b16 %v319, %v318
    %v331 = vpack.c.b16 %v321, %v320
    %v332 = vpack.c.b16 %v323, %v322
    %v333 = vpack.c.b16 %v325, %v324
    %v338 = vunpack.c.l.b16 %v290
    %v339 = vunpack.c.l.b16 %v291
    %v340 = vunpack.c.l.b16 %v292
    %v341 = vunpack.c.l.b16 %v293
    %v342 = vpack.c.b16 %v339, %v338
    %v343 = vpack.c.b16 %v341, %v340
    %vm346 = vcmask 261120
    %v348 = vsel %vm346, %v326, 0
    %v351 = vsel %vm346, %v327, 0
    %v354 = vsel %vm346, %v328, 0
    %v357 = vsel %vm346, %v329, 0
    %v360 = vsel %vm346, %v330, 0
    %v363 = vsel %vm346, %v331, 0
    %v366 = vsel %vm346, %v332, 0
    %v369 = vsel %vm346, %v333, 0
    %371 = vmatprep.subr.bf16.mxu0 0
    %372 = vmatpush1.bf16.msra.mxu0 %v342
    %373 = vmatprep.subr.bf16.mxu0 0
    %374 = vmatpush1.bf16.msra.mxu0 %v343
    %375 = vmatprep.subr.bf16.mxu0 0
    %376 = vmatpush1.bf16.msra.mxu0 0
    %377 = vmatprep.subr.bf16.mxu0 0
    %378 = vmatpush1.bf16.msra.mxu0 0
    %379 = vmatprep.subr.bf16.mxu0 0
    %380 = vmatpush1.bf16.msra.mxu0 0
    %381 = vmatprep.subr.bf16.mxu0 0
    %382 = vmatpush1.bf16.msra.mxu0 0
    %383 = vmatprep.subr.bf16.mxu0 0
    %384 = vmatpush1.bf16.msra.mxu0 0
    %385 = vmatprep.subr.bf16.mxu0 0
    %386 = vmatpush1.bf16.msra.mxu0 0
    %387 = vmatprep.subr.bf16.mxu0 0
    %388 = vmatpush1.bf16.msra.mxu0 0
    %389 = vmatprep.subr.bf16.mxu0 0
    %390 = vmatpush1.bf16.msra.mxu0 0
    %391 = vmatprep.subr.bf16.mxu0 0
    %392 = vmatpush1.bf16.msra.mxu0 0
    %393 = vmatprep.subr.bf16.mxu0 0
    %394 = vmatpush1.bf16.msra.mxu0 0
    %395 = vmatprep.subr.bf16.mxu0 0
    %396 = vmatpush1.bf16.msra.mxu0 0
    %397 = vmatprep.subr.bf16.mxu0 0
    %398 = vmatpush1.bf16.msra.mxu0 0
    %399 = vmatprep.subr.bf16.mxu0 0
    %400 = vmatpush1.bf16.msra.mxu0 0
    %401 = vmatprep.subr.bf16.mxu0 0
    %402 = vmatpush1.bf16.msra.mxu0 0
    %403 = vmatprep.mubr.bf16.mxu0 0
    %404 = vmatmul.mubr.bf16.gmra.mrb[0].mxu0 %v348
    %v405 = vpop.f32.mrb[0].mxu0
    %v406 = vadd.f32 0.0, %v405
    %v407 = vpop.f32.mrb[0].mxu0
    %v408 = vpop.f32.mrb[0].mxu0
    %v409 = vadd.f32 0.0, %v408
    %v410 = vpop.f32.mrb[0].mxu0
    %411 = vmatprep.mubr.bf16.mxu0 0
    %412 = vmatmul.mubr.bf16.gmra.mrb[0].mxu0 %v351
    %v413 = vpop.f32.mrb[0].mxu0
    %v414 = vadd.f32 0.0, %v413
    %v415 = vpop.f32.mrb[0].mxu0
    %v416 = vpop.f32.mrb[0].mxu0
    %v417 = vadd.f32 0.0, %v416
    %v418 = vpop.f32.mrb[0].mxu0
    %419 = vmatprep.mubr.bf16.mxu0 0
    %420 = vmatmul.mubr.bf16.gmra.mrb[0].mxu0 %v354
    %v421 = vpop.f32.mrb[0].mxu0
    %v422 = vadd.f32 0.0, %v421
    %v423 = vpop.f32.mrb[0].mxu0
    %v424 = vpop.f32.mrb[0].mxu0
    %v425 = vadd.f32 0.0, %v424
    %v426 = vpop.f32.mrb[0].mxu0
    %427 = vmatprep.mubr.bf16.mxu0 0
    %428 = vmatmul.mubr.bf16.gmra.mrb[0].mxu0 %v357
    %v429 = vpop.f32.mrb[0].mxu0
    %v430 = vadd.f32 0.0, %v429
    %v431 = vpop.f32.mrb[0].mxu0
    %v432 = vpop.f32.mrb[0].mxu0
    %v433 = vadd.f32 0.0, %v432
    %v434 = vpop.f32.mrb[0].mxu0
    %435 = vmatprep.mubr.bf16.mxu0 0
    %436 = vmatmul.mubr.bf16.gmra.mrb[0].mxu0 %v360
    %v437 = vpop.f32.mrb[0].mxu0
    %v438 = vadd.f32 0.0, %v437
    %v439 = vpop.f32.mrb[0].mxu0
    %v440 = vpop.f32.mrb[0].mxu0
    %v441 = vadd.f32 0.0, %v440
    %v442 = vpop.f32.mrb[0].mxu0
    %443 = vmatprep.mubr.bf16.mxu0 0
    %444 = vmatmul.mubr.bf16.gmra.mrb[0].mxu0 %v363
    %v445 = vpop.f32.mrb[0].mxu0
    %v446 = vadd.f32 0.0, %v445
    %v447 = vpop.f32.mrb[0].mxu0
    %v448 = vpop.f32.mrb[0].mxu0
    %v449 = vadd.f32 0.0, %v448
    %v450 = vpop.f32.mrb[0].mxu0
    %451 = vmatprep.mubr.bf16.mxu0 0
    %452 = vmatmul.mubr.bf16.gmra.mrb[0].mxu0 %v366
    %v453 = vpop.f32.mrb[0].mxu0
    %v454 = vadd.f32 0.0, %v453
    %v455 = vpop.f32.mrb[0].mxu0
    %v456 = vpop.f32.mrb[0].mxu0
    %v457 = vadd.f32 0.0, %v456
    %v458 = vpop.f32.mrb[0].mxu0
    %459 = vmatprep.mubr.bf16.mxu0 0
    %460 = vmatmul.mubr.bf16.gmra.mrb[0].mxu0 %v369
    %v461 = vpop.f32.mrb[0].mxu0
    %v462 = vadd.f32 0.0, %v461
    %v463 = vpop.f32.mrb[0].mxu0
    %v464 = vpop.f32.mrb[0].mxu0
    %v465 = vadd.f32 0.0, %v464
    %v466 = vpop.f32.mrb[0].mxu0
    %467 = vdwg.mxu0
    %v472 = vunpack.c.l.b16 %v286
    %v473 = vunpack.c.l.b16 %v287
    %v474 = vunpack.c.l.b16 %v288
    %v475 = vunpack.c.l.b16 %v289
    %v476 = vpack.c.b16 %v473, %v472
    %v477 = vpack.c.b16 %v475, %v474
    %v481 = vsel %vm346, %v278, 0
    %v484 = vsel %vm346, %v279, 0
    %v487 = vsel %vm346, %v280, 0
    %v490 = vsel %vm346, %v281, 0
    %v493 = vsel %vm346, %v282, 0
    %v496 = vsel %vm346, %v283, 0
    %v499 = vsel %vm346, %v284, 0
    %v502 = vsel %vm346, %v285, 0
    %504 = vmatprep.subr.bf16.mxu0 0
    %505 = vmatpush1.bf16.msra.mxu0 %v476
    %506 = vmatprep.subr.bf16.mxu0 0
    %507 = vmatpush1.bf16.msra.mxu0 %v477
    %508 = vmatprep.subr.bf16.mxu0 0
    %509 = vmatpush1.bf16.msra.mxu0 0
    %510 = vmatprep.subr.bf16.mxu0 0
    %511 = vmatpush1.bf16.msra.mxu0 0
    %512 = vmatprep.subr.bf16.mxu0 0
    %513 = vmatpush1.bf16.msra.mxu0 0
    %514 = vmatprep.subr.bf16.mxu0 0
    %515 = vmatpush1.bf16.msra.mxu0 0
    %516 = vmatprep.subr.bf16.mxu0 0
    %517 = vmatpush1.bf16.msra.mxu0 0
    %518 = vmatprep.subr.bf16.mxu0 0
    %519 = vmatpush1.bf16.msra.mxu0 0
    %520 = vmatprep.subr.bf16.mxu0 0
    %521 = vmatpush1.bf16.msra.mxu0 0
    %522 = vmatprep.subr.bf16.mxu0 0
    %523 = vmatpush1.bf16.msra.mxu0 0
    %524 = vmatprep.subr.bf16.mxu0 0
    %525 = vmatpush1.bf16.msra.mxu0 0
    %526 = vmatprep.subr.bf16.mxu0 0
    %527 = vmatpush1.bf16.msra.mxu0 0
    %528 = vmatprep.subr.bf16.mxu0 0
    %529 = vmatpush1.bf16.msra.mxu0 0
    %530 = vmatprep.subr.bf16.mxu0 0
    %531 = vmatpush1.bf16.msra.mxu0 0
    %532 = vmatprep.subr.bf16.mxu0 0
    %533 = vmatpush1.bf16.msra.mxu0 0
    %534 = vmatprep.subr.bf16.mxu0 0
    %535 = vmatpush1.bf16.msra.mxu0 0
    %536 = vmatprep.mubr.bf16.mxu0 0
    %537 = vmatmul.mubr.bf16.gmra.mrb[0].mxu0 %v481
    %v538 = vpop.f32.mrb[0].mxu0
    %v539 = vadd.f32 %v406, %v538
    %v540 = vpop.f32.mrb[0].mxu0
    %v541 = vpop.f32.mrb[0].mxu0
    %v542 = vadd.f32 %v409, %v541
    %v543 = vpop.f32.mrb[0].mxu0
    %544 = vmatprep.mubr.bf16.mxu0 0
    %545 = vmatmul.mubr.bf16.gmra.mrb[0].mxu0 %v484
    %v546 = vpop.f32.mrb[0].mxu0
    %v547 = vadd.f32 %v414, %v546
    %v548 = vpop.f32.mrb[0].mxu0
    %v549 = vpop.f32.mrb[0].mxu0
    %v550 = vadd.f32 %v417, %v549
    %v551 = vpop.f32.mrb[0].mxu0
    %552 = vmatprep.mubr.bf16.mxu0 0
    %553 = vmatmul.mubr.bf16.gmra.mrb[0].mxu0 %v487
    %v554 = vpop.f32.mrb[0].mxu0
    %v555 = vadd.f32 %v422, %v554
    %v556 = vpop.f32.mrb[0].mxu0
    %v557 = vpop.f32.mrb[0].mxu0
    %v558 = vadd.f32 %v425, %v557
    %v559 = vpop.f32.mrb[0].mxu0
    %560 = vmatprep.mubr.bf16.mxu0 0
    %561 = vmatmul.mubr.bf16.gmra.mrb[0].mxu0 %v490
    %v562 = vpop.f32.mrb[0].mxu0
    %v563 = vadd.f32 %v430, %v562
    %v564 = vpop.f32.mrb[0].mxu0
    %v565 = vpop.f32.mrb[0].mxu0
    %v566 = vadd.f32 %v433, %v565
    %v567 = vpop.f32.mrb[0].mxu0
    %568 = vmatprep.mubr.bf16.mxu0 0
    %569 = vmatmul.mubr.bf16.gmra.mrb[0].mxu0 %v493
    %v570 = vpop.f32.mrb[0].mxu0
    %v571 = vadd.f32 %v438, %v570
    %v572 = vpop.f32.mrb[0].mxu0
    %v573 = vpop.f32.mrb[0].mxu0
    %v574 = vadd.f32 %v441, %v573
    %v575 = vpop.f32.mrb[0].mxu0
    %576 = vmatprep.mubr.bf16.mxu0 0
    %577 = vmatmul.mubr.bf16.gmra.mrb[0].mxu0 %v496
    %v578 = vpop.f32.mrb[0].mxu0
    %v579 = vadd.f32 %v446, %v578
    %v580 = vpop.f32.mrb[0].mxu0
    %v581 = vpop.f32.mrb[0].mxu0
    %v582 = vadd.f32 %v449, %v581
    %v583 = vpop.f32.mrb[0].mxu0
    %584 = vmatprep.mubr.bf16.mxu0 0
    %585 = vmatmul.mubr.bf16.gmra.mrb[0].mxu0 %v499
    %v586 = vpop.f32.mrb[0].mxu0
    %v587 = vadd.f32 %v454, %v586
    %v588 = vpop.f32.mrb[0].mxu0
    %v589 = vpop.f32.mrb[0].mxu0
    %v590 = vadd.f32 %v457, %v589
    %v591 = vpop.f32.mrb[0].mxu0
    %592 = vmatprep.mubr.bf16.mxu0 0
    %593 = vmatmul.mubr.bf16.gmra.mrb[0].mxu0 %v502
    %v594 = vpop.f32.mrb[0].mxu0
    %v595 = vadd.f32 %v462, %v594
    %v596 = vpop.f32.mrb[0].mxu0
    %v597 = vpop.f32.mrb[0].mxu0
    %v598 = vadd.f32 %v465, %v597
    %v599 = vpop.f32.mrb[0].mxu0
    %600 = vdwg.mxu0
    %v601 = vmax.f32 %v539, 0.0
    %v602 = vmax.f32 %v542, 0.0
    %v603 = vmax.f32 %v547, 0.0
    %v604 = vmax.f32 %v550, 0.0
    %v605 = vmax.f32 %v555, 0.0
    %v606 = vmax.f32 %v558, 0.0
    %v607 = vmax.f32 %v563, 0.0
    %v608 = vmax.f32 %v566, 0.0
    %v609 = vmax.f32 %v571, 0.0
    %v610 = vmax.f32 %v574, 0.0
    %v611 = vmax.f32 %v579, 0.0
    %v612 = vmax.f32 %v582, 0.0
    %v613 = vmax.f32 %v587, 0.0
    %v614 = vmax.f32 %v590, 0.0
    %v615 = vmax.f32 %v595, 0.0
    %v616 = vmax.f32 %v598, 0.0
    %v617 = vpack.c.bf16 %v602, %v601
    %v618 = vpack.c.bf16 %v604, %v603
    %v619 = vpack.c.bf16 %v606, %v605
    %v620 = vpack.c.bf16 %v608, %v607
    %v621 = vpack.c.bf16 %v610, %v609
    %v622 = vpack.c.bf16 %v612, %v611
    %v623 = vpack.c.bf16 %v614, %v613
    %v624 = vpack.c.bf16 %v616, %v615
    %v633 = vunpack.c.l.b16 %v617
    %v634 = vunpack.c.h.b16 %v617
    %v635 = vunpack.c.l.b16 %v618
    %v636 = vunpack.c.h.b16 %v618
    %v637 = vunpack.c.l.b16 %v619
    %v638 = vunpack.c.h.b16 %v619
    %v639 = vunpack.c.l.b16 %v620
    %v640 = vunpack.c.h.b16 %v620
    %v641 = vunpack.c.l.b16 %v621
    %v642 = vunpack.c.h.b16 %v621
    %v643 = vunpack.c.l.b16 %v622
    %v644 = vunpack.c.h.b16 %v622
    %v645 = vunpack.c.l.b16 %v623
    %v646 = vunpack.c.h.b16 %v623
    %v647 = vunpack.c.l.b16 %v624
    %v648 = vunpack.c.h.b16 %v624
    %v649 = vpack.c.b16 %v633, %v633
    %v650 = vpack.c.b16 %v634, %v634
    %v651 = vpack.c.b16 %v635, %v635
    %v652 = vpack.c.b16 %v636, %v636
    %v653 = vpack.c.b16 %v637, %v637
    %v654 = vpack.c.b16 %v638, %v638
    %v655 = vpack.c.b16 %v639, %v639
    %v656 = vpack.c.b16 %v640, %v640
    %v657 = vpack.c.b16 %v641, %v641
    %v658 = vpack.c.b16 %v642, %v642
    %v659 = vpack.c.b16 %v643, %v643
    %v660 = vpack.c.b16 %v644, %v644
    %v661 = vpack.c.b16 %v645, %v645
    %v662 = vpack.c.b16 %v646, %v646
    %v663 = vpack.c.b16 %v647, %v647
    %v664 = vpack.c.b16 %v648, %v648
    %vm681 = vcmask 257024
    %682 = vst.msk [vmem:[%s4] sm:$0xf] %vm681, %v649
    %683 = vst.msk [vmem:[%s4 + $0x4] sm:$0xf] %vm681, %v650
    %684 = vst.msk [vmem:[%s4 + $0x8] sm:$0xf] %vm681, %v651
    %685 = vst.msk [vmem:[%s4 + $0xc] sm:$0xf] %vm681, %v652
    %686 = vst.msk [vmem:[%s4 + $0x10] sm:$0xf] %vm681, %v653
    %687 = vst.msk [vmem:[%s4 + $0x14] sm:$0xf] %vm681, %v654
    %688 = vst.msk [vmem:[%s4 + $0x18] sm:$0xf] %vm681, %v655
    %689 = vst.msk [vmem:[%s4 + $0x1c] sm:$0xf] %vm681, %v656
    %690 = vst.msk [vmem:[%s4 + $0x20] sm:$0xf] %vm681, %v657
    %691 = vst.msk [vmem:[%s4 + $0x24] sm:$0xf] %vm681, %v658
    %692 = vst.msk [vmem:[%s4 + $0x28] sm:$0xf] %vm681, %v659
    %693 = vst.msk [vmem:[%s4 + $0x2c] sm:$0xf] %vm681, %v660
    %694 = vst.msk [vmem:[%s4 + $0x30] sm:$0xf] %vm681, %v661
    %695 = vst.msk [vmem:[%s4 + $0x34] sm:$0xf] %vm681, %v662
    %696 = vst.msk [vmem:[%s4 + $0x38] sm:$0xf] %vm681, %v663
    %697 = vst.msk [vmem:[%s4 + $0x3c] sm:$0xf] %vm681, %v664
    // Predicated region
    $region22: #{tpu_custom_call.1} parent=1 // pred_check
      _
    $region23: #{tpu_custom_call.1} parent=1 // pred_check_branch
      %699 = sbr.rel (0) target = $region25
    $region24: #{tpu_custom_call.1} parent=1 // pred_region
      _
    $region25: #{tpu_custom_call.1} parent=1 // pred_fallthru
      _
    // Predicated region
    $region26: #{tpu_custom_call.1} parent=1 // pred_check
      _
    $region27: #{tpu_custom_call.1} parent=1 // pred_check_branch
      %701 = sbr.rel (0) target = $region29
    $region28: #{tpu_custom_call.1} parent=1 // pred_region
      _
    $region29: #{tpu_custom_call.1} parent=1 // pred_fallthru
      _
    %702 = vsyncpa [#allocation3], 1

</llo_original>
